<compile_context>
chip_gen: v5e
topology: v5e:2x2
jax: 0.10.0
libtpu: 0.0.40
codegen_flags: <defaults>
</compile_context>

<pallas_src>
import jax
import jax.numpy as jnp
from jax.experimental import pallas as pl
from jax.experimental.pallas import tpu as pltpu

_LANES = 128
_TARGET_TILE_BYTES = 4 * 1024 * 1024     # per-stream, per-buffer VMEM tile
_VMEM_LIMIT_BYTES = 48 * 1024 * 1024     # 3 streams x 2 buffers x 4 MiB + headroom
_XLA_FALLBACK_BYTES = 512 * 1024         # below this, launch overhead dominates


def _add_and_norm_kernel(alpha_ref, x1_ref, x2_ref, o_ref):
    # alpha_ref: scalar-prefetch SMEM ref, shape (1,), float32.
    alpha = alpha_ref[0]
    x1 = x1_ref[...].astype(jnp.float32)
    x2 = x2_ref[...].astype(jnp.float32)
    o_ref[...] = (x1 + x2 * alpha).astype(o_ref.dtype)


def add_and_normalization(input1, input2, alpha, *, use_pallas=None):
    """input1, input2: same-shape/dtype arrays (e.g. (B, S, H)); alpha: scalar param.

    use_pallas: None = auto (size-gated), True = force kernel, False = force XLA.
    """
    assert input1.shape == input2.shape, "inputs must have identical shapes"
    assert input1.dtype == input2.dtype, "inputs must have identical dtypes"
    orig_shape = input1.shape
    out_dtype = input1.dtype
    itemsize = jnp.dtype(out_dtype).itemsize

    total = 1
    for d in orig_shape:
        total *= int(d)

    alpha_f32 = jnp.asarray(alpha, dtype=jnp.float32)

    small = total * itemsize < _XLA_FALLBACK_BYTES
    if total == 0 or use_pallas is False or (use_pallas is None and small):
        # Tiny activations: a fused XLA elementwise op beats a standalone kernel.
        res = input1.astype(jnp.float32) + input2.astype(jnp.float32) * alpha_f32
        return res.astype(out_dtype)

    # ---- pick a lane-dense (rows, cols) view, avoiding padding when possible.
    last_dim = int(orig_shape[-1]) if len(orig_shape) else 1
    pad = 0
    if last_dim % _LANES == 0:
        rows, cols = total // last_dim, last_dim
    elif total % _LANES == 0:
        rows, cols = total // _LANES, _LANES
    else:
        # Rare path: total not a multiple of 128 -> pad the flat view only.
        rows, cols = pl.cdiv(total, _LANES), _LANES
        pad = rows * _LANES - total

    if pad:
        x1 = jnp.pad(jnp.ravel(input1), (0, pad)).reshape(rows, cols)
        x2 = jnp.pad(jnp.ravel(input2), (0, pad)).reshape(rows, cols)
    else:
        x1 = input1.reshape(rows, cols)
        x2 = input2.reshape(rows, cols)

    # ---- tile rows: size by bytes; force >= 2 grid steps for mid-size inputs
    #      (v7x has 2 TensorCores; "parallel" only shards if grid >= 2).
    row_bytes = cols * itemsize
    if rows <= 64:
        tm = rows                                   # single full-array block
    else:
        tm_target = max(32, (_TARGET_TILE_BYTES // row_bytes) // 32 * 32)
        tm_half = ((pl.cdiv(rows, 2) + 31) // 32) * 32
        tm = max(32, min(tm_target, tm_half))
    grid = (pl.cdiv(rows, tm),)

    cost = pl.CostEstimate(
        flops=2 * total,
        transcendentals=0,
        bytes_accessed=3 * total * itemsize,        # 2 inputs read + 1 output written
    )

    grid_spec = pltpu.PrefetchScalarGridSpec(
        num_scalar_prefetch=1,                      # alpha -> SMEM
        grid=grid,
        in_specs=[
            pl.BlockSpec((tm, cols), lambda i, alpha_ref: (i, 0)),
            pl.BlockSpec((tm, cols), lambda i, alpha_ref: (i, 0)),
        ],
        out_specs=pl.BlockSpec((tm, cols), lambda i, alpha_ref: (i, 0)),
    )

    out2d = pl.pallas_call(
        _add_and_norm_kernel,
        out_shape=jax.ShapeDtypeStruct((rows, cols), out_dtype),
        grid_spec=grid_spec,
        compiler_params=pltpu.CompilerParams(
            dimension_semantics=("parallel",),
            vmem_limit_bytes=_VMEM_LIMIT_BYTES,
        ),
        cost_estimate=cost,
    )(alpha_f32.reshape((1,)), x1, x2)

    if pad:
        return out2d.reshape(-1)[:total].reshape(orig_shape)
    return out2d.reshape(orig_shape)


if __name__ == "__main__":
    key = jax.random.PRNGKey(0)
    k1, k2, k3, k4, k5, k6 = jax.random.split(key, 6)

    # Small shapes consistent with the module's usage (batch=2, seq=8, hidden=32).
    B, S, H = 2, 8, 32
    input1 = jax.random.normal(k1, (B, S, H), dtype=jnp.float32)
    input2 = jax.random.normal(k2, (B, S, H), dtype=jnp.float32)

    alpha0 = jnp.zeros((), dtype=jnp.float32)        # torch init: alpha = 0
    alpha1 = jnp.asarray(0.37, dtype=jnp.float32)

    # 1) Small input, auto path (XLA fallback — kernel launch would dominate).
    out = jax.block_until_ready(add_and_normalization(input1, input2, alpha0))
    ref = input1 + input2 * alpha0
    assert out.shape == ref.shape and out.dtype == ref.dtype
    assert jnp.allclose(out, ref, atol=1e-6)

    # 2) Same small input, Pallas kernel forced (single full-array block).
    out2 = jax.block_until_ready(
        add_and_normalization(input1, input2, alpha1, use_pallas=True))
    ref2 = input1 + input2 * alpha1
    assert out2.shape == ref2.shape and out2.dtype == ref2.dtype
    assert jnp.allclose(out2, ref2, atol=1e-6)

    # 3) Large input, H % 128 == 0 -> no padding, 2 grid steps, no slice-back.
    big1 = jax.random.normal(k3, (4, 1000, 384), dtype=jnp.float32)
    big2 = jax.random.normal(k4, (4, 1000, 384), dtype=jnp.float32)
    out3 = jax.block_until_ready(add_and_normalization(big1, big2, alpha1))
    ref3 = big1 + big2 * alpha1
    assert jnp.allclose(out3, ref3, atol=1e-5)

    # 4) Partial last block (rows not a multiple of tm), still no padding.
    mid1 = jax.random.normal(k5, (2, 777, 256), dtype=jnp.float32)
    mid2 = jax.random.normal(k6, (2, 777, 256), dtype=jnp.float32)
    out4 = jax.block_until_ready(add_and_normalization(mid1, mid2, alpha1))
    ref4 = mid1 + mid2 * alpha1
    assert jnp.allclose(out4, ref4, atol=1e-5)

    # 5) Rare pad path: total not a multiple of 128.
    odd1 = jax.random.normal(k1, (3, 7, 33), dtype=jnp.float32)
    odd2 = jax.random.normal(k2, (3, 7, 33), dtype=jnp.float32)
    out5 = jax.block_until_ready(
        add_and_normalization(odd1, odd2, alpha1, use_pallas=True))
    ref5 = odd1 + odd2 * alpha1
    assert jnp.allclose(out5, ref5, atol=1e-6)

    # 6) bf16 inputs: tile bytes stay constant (tm sized by bytes), f32 compute.
    bf1 = jax.random.normal(k3, (2, 64, 128), dtype=jnp.float32).astype(jnp.bfloat16)
    bf2 = jax.random.normal(k4, (2, 64, 128), dtype=jnp.float32).astype(jnp.bfloat16)
    out6 = jax.block_until_ready(
        add_and_normalization(bf1, bf2, alpha1, use_pallas=True))
    ref6 = (bf1.astype(jnp.float32) + bf2.astype(jnp.float32) * alpha1).astype(jnp.bfloat16)
    assert out6.dtype == jnp.bfloat16
    assert jnp.allclose(out6.astype(jnp.float32), ref6.astype(jnp.float32), atol=1e-2)

    print("KERNEL_OK")
</pallas_src>

<mosaic_0001>
module attributes {stable_mosaic.version = 11 : i64} {
  func.func @_add_and_norm_kernel(%arg0: i32, %arg1: memref<1xf32, #tpu.memory_space<smem>>, %arg2: memref<4x128xf32, #tpu.memory_space<vmem>>, %arg3: memref<4x128xf32, #tpu.memory_space<vmem>>, %arg4: memref<4x128xf32, #tpu.memory_space<vmem>>) attributes {dimension_semantics = [#tpu.dimension_semantics<parallel>], iteration_bounds = array<i64: 1>, scalar_prefetch = 1 : i64, scratch_operands = 0 : i64, tpu.core_type = #tpu.core_type<tc>, window_params = [{transform_indices = @transform_0, window_bounds = array<i64: 4, 128>}, {transform_indices = @transform_1, window_bounds = array<i64: 4, 128>}, {transform_indices = @transform_2, window_bounds = array<i64: 4, 128>}]} {
    %c0 = arith.constant 0 : index
    %0 = memref.load %arg1[%c0] : memref<1xf32, #tpu.memory_space<smem>>
    %c0_0 = arith.constant 0 : index
    %c0_1 = arith.constant 0 : index
    %1 = vector.load %arg2[%c0_0, %c0_1] : memref<4x128xf32, #tpu.memory_space<vmem>>, vector<4x128xf32>
    %c0_2 = arith.constant 0 : index
    %c0_3 = arith.constant 0 : index
    %2 = vector.load %arg3[%c0_2, %c0_3] : memref<4x128xf32, #tpu.memory_space<vmem>>, vector<4x128xf32>
    %3 = vector.broadcast %0 : f32 to vector<4x128xf32>
    %4 = arith.mulf %2, %3 : vector<4x128xf32>
    %5 = arith.addf %1, %4 : vector<4x128xf32>
    %c0_4 = arith.constant 0 : index
    %c0_5 = arith.constant 0 : index
    %6 = vector.load %arg4[%c0_4, %c0_5] : memref<4x128xf32, #tpu.memory_space<vmem>>, vector<4x128xf32>
    tpu.vector_store %arg4[%c0_4, %c0_5], %5 {strides = array<i32>} : memref<4x128xf32, #tpu.memory_space<vmem>>, vector<4x128xf32>,
    return
  }
  func.func @transform_0(%arg0: i32, %arg1: memref<1xf32, #tpu.memory_space<smem>>) -> (i32, i32) {
    %c0_i32 = arith.constant 0 : i32
    %c0_i32_0 = arith.constant 0 : i32
    return %arg0, %c0_i32 : i32, i32
  }
  func.func @transform_1(%arg0: i32, %arg1: memref<1xf32, #tpu.memory_space<smem>>) -> (i32, i32) {
    %c0_i32 = arith.constant 0 : i32
    %c0_i32_0 = arith.constant 0 : i32
    return %arg0, %c0_i32 : i32, i32
  }
  func.func @transform_2(%arg0: i32, %arg1: memref<1xf32, #tpu.memory_space<smem>>) -> (i32, i32) {
    %c0_i32 = arith.constant 0 : i32
    %c0_i32_0 = arith.constant 0 : i32
    return %arg0, %c0_i32 : i32, i32
  }
}

</mosaic_0001>

<llo_original>
// kernel: tpu_custom_call.1
$region0: #{tpu_custom_call.1}
  #allocation0 [shape = 'u32[]', space=smem, size = 0x4, offset = 0x4, fixed_abs, tag = 'smem constant byte address 0x4 - core index']
  #allocation1 [shape = 'u32[72,128]{1,0:T(1,128)}', space=vmem, size = 0x9000, scoped, tag = 'internal scratch']
  #allocation2 [shape = 's32[1]{0}', space=sflag, size = 0x4, scoped, tag = 'scoped memory for tpu_custom_call.1']
  #allocation3 [shape = 'f32[1]{0:T(128)S(6)}', space=smem, size = 0x200, scoped, tag = 'prefetched SMEM operand 0']
  %s0 = inlined_call_operand.<no memory space> [shape: f32[1], index: 0, kind: input, shape index: {}]
  %s1 = inlined_call_operand.hbm [shape: f32[4,128], index: 1, kind: input, shape index: {}]
  %s2 = inlined_call_operand.hbm [shape: f32[4,128], index: 2, kind: input, shape index: {}]
  %s3 = inlined_call_operand.hbm [shape: f32[4,128], index: 3, kind: output, shape index: {}]
  %s4 = sld [smem:[#allocation0]]
  $region26: #{tpu_custom_call.1} parent=0
    _
  %s6 = ssub.s32 1, %s4
  %s7 = scalar_select 0, %s6, %s4
  %8 = sst [smem:[#allocation3]] %s0
  $region1: #{tpu_custom_call.1} parent=0
    #allocation4 [shape = 'u8[2048]{0}', space=vmem, size = 0x800, scoped, tag = 'input window, operand 1, single buffered']
    #allocation5 [shape = 's32[1]{0}', space=sflag, size = 0x4, scoped, tag = 'scoped memory for tpu_custom_call.1']
    #allocation6 [shape = 's32[1]{0}', space=sflag, size = 0x4, scoped, tag = 'scoped memory for tpu_custom_call.1']
    #allocation7 [shape = 'u8[2048]{0}', space=vmem, size = 0x800, scoped, tag = 'input window, operand 2, single buffered']
    #allocation8 [shape = 's32[1]{0}', space=sflag, size = 0x4, scoped, tag = 'scoped memory for tpu_custom_call.1']
    #allocation9 [shape = 'u8[2048]{0}', space=vmem, size = 0x800, scoped, tag = 'output window, operand 0, single buffered']
    %9 = vsyncpa [#allocation5], 0
    %10 = vsyncpa [#allocation8], 0
    %11 = vsyncpa [#allocation6], 0
    // Predicated region
    $region2: #{tpu_custom_call.1} parent=1 // pred_check
      _
    $region3: #{tpu_custom_call.1} parent=1 // pred_check_branch
      %13 = sbr.rel (0) target = $region5
    $region4: #{tpu_custom_call.1} parent=1 // pred_region
      %15 = vsyncadd [#allocation5], 0
      %s17 = sshll.u32 %s1, 4
      %s18 = int_to_ptr.hbm [resolvable:$true] %s17
      %s19 = sshll.u32 [#allocation4], 4
      %s20 = int_to_ptr.vmem [resolvable:$true] %s19
      %22 = dma.hbm_to_vmem [thread:$0]  %s18, 64, %s20, [#allocation5]
    $region5: #{tpu_custom_call.1} parent=1 // pred_fallthru
      _
    // Predicated region
    $region6: #{tpu_custom_call.1} parent=1 // pred_check
      _
    $region7: #{tpu_custom_call.1} parent=1 // pred_check_branch
      %24 = sbr.rel (0) target = $region9
    $region8: #{tpu_custom_call.1} parent=1 // pred_region
      %26 = vsyncadd [#allocation8], 0
      %s28 = sshll.u32 %s2, 4
      %s29 = int_to_ptr.hbm [resolvable:$true] %s28
      %s30 = sshll.u32 [#allocation7], 4
      %s31 = int_to_ptr.vmem [resolvable:$true] %s30
      %33 = dma.hbm_to_vmem [thread:$0]  %s29, 64, %s31, [#allocation8]
    $region9: #{tpu_custom_call.1} parent=1 // pred_fallthru
      _
    // Predicated region
    $region10: #{tpu_custom_call.1} parent=1 // pred_check
      _
    $region11: #{tpu_custom_call.1} parent=1 // pred_check_branch
      %35 = sbr.rel (0) target = $region13
    $region12: #{tpu_custom_call.1} parent=1 // pred_region
      %37 = dma.done [#allocation5], 64
    $region13: #{tpu_custom_call.1} parent=1 // pred_fallthru
      _
    // Predicated region
    $region14: #{tpu_custom_call.1} parent=1 // pred_check
      _
    $region15: #{tpu_custom_call.1} parent=1 // pred_check_branch
      %39 = sbr.rel (0) target = $region17
    $region16: #{tpu_custom_call.1} parent=1 // pred_region
      %41 = dma.done [#allocation8], 64
    $region17: #{tpu_custom_call.1} parent=1 // pred_fallthru
      _
    %s42 = sld [smem:[#allocation3]]
    %v43 = vld [vmem:[#allocation4] sm:$0xf]
    %v44 = vld [vmem:[#allocation7] sm:$0xf]
    %v45 = vstv %s42
    %v46 = vmul.f32 %v44, %v45
    %v47 = vadd.f32 %v43, %v46
    %48 = vst [vmem:[#allocation9] sm:$0xf] %v47
    // Predicated region
    $region18: #{tpu_custom_call.1} parent=1 // pred_check
      _
    $region19: #{tpu_custom_call.1} parent=1 // pred_check_branch
      %50 = sbr.rel (0) target = $region21
    $region20: #{tpu_custom_call.1} parent=1 // pred_region
      %52 = vsyncadd [#allocation6], 0
      %s54 = sshll.u32 [#allocation9], 4
      %s55 = int_to_ptr.vmem [resolvable:$true] %s54
      %s56 = sshll.u32 %s3, 4
      %s57 = int_to_ptr.hbm [resolvable:$true] %s56
      %59 = dma.vmem_to_hbm [thread:$0]  %s55, 64, %s57, [#allocation6]
    $region21: #{tpu_custom_call.1} parent=1 // pred_fallthru
      _
    // Predicated region
    $region22: #{tpu_custom_call.1} parent=1 // pred_check
      _
    $region23: #{tpu_custom_call.1} parent=1 // pred_check_branch
      %61 = sbr.rel (0) target = $region25
    $region24: #{tpu_custom_call.1} parent=1 // pred_region
      %63 = dma.done [#allocation6], 64
    $region25: #{tpu_custom_call.1} parent=1 // pred_fallthru
      _
    %64 = vsyncpa [#allocation5], 1
    %65 = vsyncpa [#allocation8], 1
    %66 = vsyncpa [#allocation6], 1

</llo_original>
